<compile_context>
chip_gen: v7x
topology: tpu7x:2x2x1
jax: 0.10.0
libtpu: 0.0.40
codegen_flags: <defaults>
</compile_context>

<pallas_src>
import functools

import jax
import jax.numpy as jnp
from jax.experimental import pallas as pl
from jax.experimental.pallas import tpu as pltpu

LANES = 128
SUBLANES = 8
MAX_TILE_ROWS = 2048  # (2048, 128) f32 = 1 MiB block; 2 inputs x 2 buffers = 4 MiB VMEM


def _round_up(x, m):
    return (x + m - 1) // m * m


def _l2_partial_kernel(pred_ref, gt_ref, out_ref, *, tile_rows, rows_total, needs_mask):
    """Per-block sum of squared differences, reduced to an (8, 128) vector."""
    d = pred_ref[...].astype(jnp.float32) - gt_ref[...].astype(jnp.float32)
    sq = d * d
    if needs_mask:
        # Only the last block can read past the array; zero those rows.
        i = pl.program_id(0)
        row_ids = (
            jax.lax.broadcasted_iota(jnp.int32, (tile_rows, 1), 0) + i * tile_rows
        )
        sq = jnp.where(row_ids < rows_total, sq, 0.0)
    # Sublane-aligned partial reduction: pure VPU adds across vregs.
    out_ref[...] = sq.reshape(tile_rows // SUBLANES, SUBLANES, LANES).sum(axis=0)


def l2_noise_loss(pred, gt):
    """Pallas equivalent of L2_NoiseLoss.forward: ((pred - gt)**2).mean()."""
    assert pred.shape == gt.shape, "pred and noise_gt must have the same shape"
    n_elem = pred.size

    flat_pred = pred.reshape(-1)
    flat_gt = gt.reshape(-1)

    # Pad only to the next (8 x 128) granule (<= 1023 elements); zeros
    # contribute 0 to the squared-diff sum.  For typical NCHW tensors
    # (H, W powers of two) this branch is never taken.
    padded = _round_up(n_elem, SUBLANES * LANES)
    pad = padded - n_elem
    if pad:
        flat_pred = jnp.pad(flat_pred, (0, pad))
        flat_gt = jnp.pad(flat_gt, (0, pad))

    rows = padded // LANES               # multiple of 8
    tile_rows = min(MAX_TILE_ROWS, rows)  # multiple of 8, <= rows
    num_blocks = pl.cdiv(rows, tile_rows)
    needs_mask = (rows % tile_rows) != 0  # tail block reads OOB (garbage) rows

    pred2d = flat_pred.reshape(rows, LANES)
    gt2d = flat_gt.reshape(rows, LANES)

    kernel = functools.partial(
        _l2_partial_kernel,
        tile_rows=tile_rows,
        rows_total=rows,
        needs_mask=needs_mask,
    )

    bytes_in = 2 * n_elem * pred.dtype.itemsize
    bytes_out = num_blocks * SUBLANES * LANES * 4

    partials = pl.pallas_call(
        kernel,
        out_shape=jax.ShapeDtypeStruct((num_blocks * SUBLANES, LANES), jnp.float32),
        grid_spec=pltpu.PrefetchScalarGridSpec(
            num_scalar_prefetch=0,
            grid=(num_blocks,),
            in_specs=[
                pl.BlockSpec((tile_rows, LANES), lambda i: (i, 0)),
                pl.BlockSpec((tile_rows, LANES), lambda i: (i, 0)),
            ],
            out_specs=pl.BlockSpec((SUBLANES, LANES), lambda i: (i, 0)),
        ),
        compiler_params=pltpu.CompilerParams(
            # Independent partial sums -> parallel grid axis (megacore on v7x).
            dimension_semantics=("parallel",),
        ),
        cost_estimate=pl.CostEstimate(
            flops=3 * n_elem,
            transcendentals=0,
            bytes_accessed=bytes_in + bytes_out,
        ),
    )(pred2d, gt2d)

    # Tiny final reduction + mean over the ORIGINAL (unpadded) element count.
    return jnp.sum(partials) * (1.0 / n_elem)


def l2_noise_loss_forward(data_dict):
    """Mirrors L2_NoiseLoss.forward(data_dict)."""
    # loss_mask / zero_mask are accessed by the PyTorch module but never used.
    _ = data_dict["loss_mask"]
    _ = data_dict["zero_mask"]
    return l2_noise_loss(data_dict["pred"], data_dict["noise_gt"])


if __name__ == "__main__":
    key = jax.random.PRNGKey(0)
    k1, k2, k3, k4 = jax.random.split(key, 4)

    # NCHW, matching the PyTorch convention.
    B, C, H, W = 2, 4, 16, 16
    pred = jax.random.normal(k1, (B, C, H, W), dtype=jnp.float32)
    gt = jax.random.normal(k2, (B, C, H, W), dtype=jnp.float32)

    data_dict = {
        "pred": pred,
        "noise_gt": gt,
        "loss_mask": jnp.ones((B, 1, H, W), dtype=jnp.float32),   # unused
        "zero_mask": jnp.ones((B, 1, H, W), dtype=jnp.float32),   # unused
    }

    loss = jax.block_until_ready(l2_noise_loss_forward(data_dict))
    ref = jnp.mean((pred - gt) ** 2)
    assert jnp.allclose(loss, ref, rtol=1e-5, atol=1e-6), (loss, ref)

    # Odd-sized case exercising the (8 x 128)-granule pad path.
    pred2 = jax.random.normal(k3, (2, 3, 7, 5), dtype=jnp.float32)
    gt2 = jax.random.normal(k4, (2, 3, 7, 5), dtype=jnp.float32)
    loss2 = jax.block_until_ready(l2_noise_loss(pred2, gt2))
    ref2 = jnp.mean((pred2 - gt2) ** 2)
    assert jnp.allclose(loss2, ref2, rtol=1e-5, atol=1e-6), (loss2, ref2)

    print("KERNEL_OK")
</pallas_src>

<mosaic_0001>
module attributes {stable_mosaic.version = 11 : i64} {
  func.func @_l2_partial_kernel(%arg0: i32, %arg1: memref<16x128xf32, #tpu.memory_space<vmem>>, %arg2: memref<16x128xf32, #tpu.memory_space<vmem>>, %arg3: memref<8x128xf32, #tpu.memory_space<vmem>>) attributes {dimension_semantics = [#tpu.dimension_semantics<parallel>], iteration_bounds = array<i64: 1>, scalar_prefetch = 0 : i64, scratch_operands = 0 : i64, tpu.core_type = #tpu.core_type<tc>, window_params = [{transform_indices = @transform_0, window_bounds = array<i64: 16, 128>}, {transform_indices = @transform_1, window_bounds = array<i64: 16, 128>}, {transform_indices = @transform_2, window_bounds = array<i64: 8, 128>}]} {
    %c0 = arith.constant 0 : index
    %c0_0 = arith.constant 0 : index
    %0 = vector.load %arg1[%c0, %c0_0] : memref<16x128xf32, #tpu.memory_space<vmem>>, vector<16x128xf32>
    %c0_1 = arith.constant 0 : index
    %c0_2 = arith.constant 0 : index
    %1 = vector.load %arg2[%c0_1, %c0_2] : memref<16x128xf32, #tpu.memory_space<vmem>>, vector<16x128xf32>
    %2 = arith.subf %0, %1 : vector<16x128xf32>
    %3 = arith.mulf %2, %2 : vector<16x128xf32>
    %4 = vector.shape_cast %3 : vector<16x128xf32> to vector<2x8x128xf32>
    %cst = arith.constant dense<0.000000e+00> : vector<8x128xf32>
    %5 = vector.multi_reduction <add>, %4, %cst [0] : vector<2x8x128xf32> to vector<8x128xf32>
    %c0_3 = arith.constant 0 : index
    %c0_4 = arith.constant 0 : index
    %6 = vector.load %arg3[%c0_3, %c0_4] : memref<8x128xf32, #tpu.memory_space<vmem>>, vector<8x128xf32>
    tpu.vector_store %arg3[%c0_3, %c0_4], %5 {strides = array<i32>} : memref<8x128xf32, #tpu.memory_space<vmem>>, vector<8x128xf32>,
    return
  }
  func.func @transform_0(%arg0: i32) -> (i32, i32) {
    %c0_i32 = arith.constant 0 : i32
    %c0_i32_0 = arith.constant 0 : i32
    return %arg0, %c0_i32 : i32, i32
  }
  func.func @transform_1(%arg0: i32) -> (i32, i32) {
    %c0_i32 = arith.constant 0 : i32
    %c0_i32_0 = arith.constant 0 : i32
    return %arg0, %c0_i32 : i32, i32
  }
  func.func @transform_2(%arg0: i32) -> (i32, i32) {
    %c0_i32 = arith.constant 0 : i32
    %c0_i32_0 = arith.constant 0 : i32
    return %arg0, %c0_i32 : i32, i32
  }
}

</mosaic_0001>

<llo_original>
// kernel: tpu_custom_call.1
$region0: #{tpu_custom_call.1}
  #allocation0 [shape = 'u32[]', space=smem, size = 0x4, offset = 0x4, fixed_abs, tag = 'smem constant byte address 0x4 - core index']
  #allocation1 [shape = 'u32[144,128]{1,0:T(1,128)}', space=vmem, size = 0x12000, scoped, tag = 'internal scratch']
  %s0 = inlined_call_operand.hbm [shape: f32[16,128], index: 0, kind: input, shape index: {}]
  %s1 = inlined_call_operand.hbm [shape: f32[16,128], index: 1, kind: input, shape index: {}]
  %s2 = inlined_call_operand.hbm [shape: f32[8,128], index: 2, kind: output, shape index: {}]
  %s3 = sld [smem:[#allocation0]]
  $region26: #{tpu_custom_call.1} parent=0
    _
  %s5 = ssub.s32 1, %s3
  %s6 = scalar_select 0, %s5, %s3
  $region1: #{tpu_custom_call.1} parent=0
    #allocation2 [shape = 'u8[8192]{0}', space=vmem, size = 0x2000, scoped, tag = 'input window, operand 0, single buffered']
    #allocation3 [shape = 's32[1]{0}', space=sflag, size = 0x4, scoped, tag = 'scoped memory for tpu_custom_call.1']
    #allocation4 [shape = 's32[1]{0}', space=sflag, size = 0x4, scoped, tag = 'scoped memory for tpu_custom_call.1']
    #allocation5 [shape = 'u8[8192]{0}', space=vmem, size = 0x2000, scoped, tag = 'input window, operand 1, single buffered']
    #allocation6 [shape = 's32[1]{0}', space=sflag, size = 0x4, scoped, tag = 'scoped memory for tpu_custom_call.1']
    #allocation7 [shape = 'u8[4096]{0}', space=vmem, size = 0x1000, scoped, tag = 'output window, operand 0, single buffered']
    %7 = vsyncpa [#allocation3], 0
    %8 = vsyncpa [#allocation6], 0
    %9 = vsyncpa [#allocation4], 0
    // Predicated region
    $region2: #{tpu_custom_call.1} parent=1 // pred_check
      _
    $region3: #{tpu_custom_call.1} parent=1 // pred_check_branch
      %11 = sbr.rel (0) target = $region5
    $region4: #{tpu_custom_call.1} parent=1 // pred_region
      %s13 = ssub.s32 256, 256
      %14 = vsyncadd [#allocation3], %s13
      %s15 = sshll.u32 [#allocation2], 4
      %s16 = int_to_ptr.vmem [resolvable:$true] %s15
      %21 = dma.hbm_to_vmem [thread:$0]  %s0, 256, %s16, [#allocation3], 128, 128, 8
    $region5: #{tpu_custom_call.1} parent=1 // pred_fallthru
      _
    // Predicated region
    $region6: #{tpu_custom_call.1} parent=1 // pred_check
      _
    $region7: #{tpu_custom_call.1} parent=1 // pred_check_branch
      %23 = sbr.rel (0) target = $region9
    $region8: #{tpu_custom_call.1} parent=1 // pred_region
      %s25 = ssub.s32 256, 256
      %26 = vsyncadd [#allocation6], %s25
      %s27 = sshll.u32 [#allocation5], 4
      %s28 = int_to_ptr.vmem [resolvable:$true] %s27
      %33 = dma.hbm_to_vmem [thread:$0]  %s1, 256, %s28, [#allocation6], 128, 128, 8
    $region9: #{tpu_custom_call.1} parent=1 // pred_fallthru
      _
    // Predicated region
    $region10: #{tpu_custom_call.1} parent=1 // pred_check
      _
    $region11: #{tpu_custom_call.1} parent=1 // pred_check_branch
      %35 = sbr.rel (0) target = $region13
    $region12: #{tpu_custom_call.1} parent=1 // pred_region
      %36 = dma.done [#allocation3], 256
    $region13: #{tpu_custom_call.1} parent=1 // pred_fallthru
      _
    // Predicated region
    $region14: #{tpu_custom_call.1} parent=1 // pred_check
      _
    $region15: #{tpu_custom_call.1} parent=1 // pred_check_branch
      %38 = sbr.rel (0) target = $region17
    $region16: #{tpu_custom_call.1} parent=1 // pred_region
      %39 = dma.done [#allocation6], 256
    $region17: #{tpu_custom_call.1} parent=1 // pred_fallthru
      _
    %v40 = vld [vmem:[#allocation2] sm:$0xff]
    %v41 = vld [vmem:[#allocation2 + $0x8] sm:$0xff]
    %v42 = vld [vmem:[#allocation5] sm:$0xff]
    %v43 = vld [vmem:[#allocation5 + $0x8] sm:$0xff]
    %v44 = vsub.f32 %v40, %v42
    %v45 = vsub.f32 %v41, %v43
    %v46 = vmul.f32 %v44, %v44
    %v47 = vmul.f32 %v45, %v45
    %v48 = vadd.f32 %v46, %v47
    %49 = vst [vmem:[#allocation7] sm:$0xff] %v48
    // Predicated region
    $region18: #{tpu_custom_call.1} parent=1 // pred_check
      _
    $region19: #{tpu_custom_call.1} parent=1 // pred_check_branch
      %51 = sbr.rel (0) target = $region21
    $region20: #{tpu_custom_call.1} parent=1 // pred_region
      %s53 = ssub.s32 128, 128
      %54 = vsyncadd [#allocation4], %s53
      %s56 = sshll.u32 [#allocation7], 4
      %s57 = int_to_ptr.vmem [resolvable:$true] %s56
      %59 = dma.vmem_to_hbm [thread:$0]  %s57, 128, %s2, [#allocation4]
    $region21: #{tpu_custom_call.1} parent=1 // pred_fallthru
      _
    // Predicated region
    $region22: #{tpu_custom_call.1} parent=1 // pred_check
      _
    $region23: #{tpu_custom_call.1} parent=1 // pred_check_branch
      %61 = sbr.rel (0) target = $region25
    $region24: #{tpu_custom_call.1} parent=1 // pred_region
      %62 = dma.done [#allocation4], 128
    $region25: #{tpu_custom_call.1} parent=1 // pred_fallthru
      _
    %63 = vsyncpa [#allocation3], 1
    %64 = vsyncpa [#allocation6], 1
    %65 = vsyncpa [#allocation4], 1

</llo_original>
